<compile_context>
chip_gen: v7x
topology: tpu7x:2x2x1
jax: 0.10.0
libtpu: 0.0.40
codegen_flags: <defaults>
</compile_context>

<pallas_src>
from functools import partial

import jax
import jax.numpy as jnp
from jax.experimental import pallas as pl
from jax.experimental.pallas import tpu as pltpu


# --------------------------------------------------------------------------
# Kernel
# --------------------------------------------------------------------------
def attn_kernel(x_ref, w_ref, b_ref, o_ref):
    bt, s, d = x_ref.shape
    h = o_ref.shape[-1]
    hp = w_ref.shape[-1] // 3            # lane-aligned per-projection width

    # Fused Q/K/V projection: one (Bt*S, D) x (D, 3*Hp) MXU matmul,
    # bf16 operands, f32 accumulation, f32 bias add.  1/sqrt(H) is already
    # folded into the Q columns of w_ref / b_ref (done once, wrapper-side).
    x2 = x_ref[...].reshape(bt * s, d).astype(jnp.bfloat16)
    qkv = jnp.dot(x2, w_ref[...], preferred_element_type=jnp.float32)
    qkv = (qkv + b_ref[...]).reshape(bt, s, 3 * hp)

    # q/k/v slices start on 128-lane tile boundaries (offsets 0, Hp, 2*Hp).
    q = qkv[..., 0 * hp:0 * hp + h].astype(jnp.bfloat16)
    k = qkv[..., 1 * hp:1 * hp + h].astype(jnp.bfloat16)
    v = qkv[..., 2 * hp:2 * hp + h].astype(jnp.bfloat16)

    # attn_scores = (Q/sqrt(H))^T K: contract over S, no explicit transpose.
    scores = jnp.einsum("bsh,bsk->bhk", q, k,
                        preferred_element_type=jnp.float32)      # (Bt, H, H)

    # Numerically-stable softmax over the last axis.
    scores = scores - jnp.max(scores, axis=-1, keepdims=True)
    e = jnp.exp(scores)
    inv = pl.reciprocal(jnp.sum(e, axis=-1, keepdims=True), approx=True)
    weights = (e * inv).astype(jnp.bfloat16)

    # out = V @ weights  -> (Bt, S, H)
    out = jnp.einsum("bsh,bhk->bsk", v, weights,
                     preferred_element_type=jnp.float32)
    o_ref[...] = out.astype(o_ref.dtype)


# --------------------------------------------------------------------------
# Wrapper-side (one-time) weight preparation and tiling heuristics
# --------------------------------------------------------------------------
def prepare_attention_weights(wq, bq, wk, bk, wv, bv):
    """Fuse Q/K/V weights once, off the hot path.

    - Folds 1/sqrt(H) into Wq / bq so the kernel has no scale multiply.
    - Pads each projection's N dim to a 128-lane boundary so in-kernel slices
      are lane-tile aligned (padded columns are zero, never read).
    - Stores the fused weight in bf16 (halves its DMA bytes); bias stays f32
      for the f32-accumulator add.
    """
    H = wq.shape[1]
    Hp = pl.cdiv(H, 128) * 128
    scale = 1.0 / (H ** 0.5)

    def pad_cols(a):
        return a if Hp == H else jnp.pad(a, ((0, 0), (0, Hp - H)))

    w_qkv = jnp.concatenate(
        [pad_cols(wq * scale), pad_cols(wk), pad_cols(wv)], axis=1
    ).astype(jnp.bfloat16)                                        # (D, 3*Hp)
    b_qkv = jnp.concatenate(
        [pad_cols(bq * scale), pad_cols(bk), pad_cols(bv)], axis=1
    ).astype(jnp.float32)                                         # (1, 3*Hp)
    return w_qkv, b_qkv


def _vmem_budget_bytes():
    """Generation-aware scoped-VMEM budget (v7x: 64 MiB phys, v5e/v6e: 128)."""
    try:
        phys = int(pltpu.get_tpu_info().vmem_capacity_bytes)
    except Exception:
        phys = 64 * 1024 * 1024          # conservative (v7x-sized) fallback
    return min(max(phys // 2, 32 * 1024 * 1024), 64 * 1024 * 1024)


def _pick_batch_block(B, S, D, H, Hp, vmem_budget):
    """Batch rows per grid step.

    Grow Bt until Bt*S >= ~256 projection rows (fills the v6e/v7x 256-wide MXU
    M dim) or Bt == B -- a single grid step for tiny batches; only shrink if
    the VMEM estimate exceeds ~3/4 of the scoped budget.
    """
    target = max(1, pl.cdiv(256, S))
    bt = max(1, min(B, target))

    def vmem_bytes(b):
        x_blk = 2 * b * S * D * 4                 # double-buffered f32 x block
        o_blk = 2 * b * S * H * 4                 # double-buffered f32 out block
        wgt = D * 3 * Hp * 2 * 2 + 3 * Hp * 4 * 2  # bf16 weight (x2) + f32 bias
        live = 4 * b * S * 3 * Hp * 4             # qkv / q,k,v / out temporaries
        return x_blk + o_blk + wgt + live

    while bt > 1 and vmem_bytes(bt) > (3 * vmem_budget) // 4:
        bt -= 1
    return bt


# --------------------------------------------------------------------------
# Public entry point (weights are pre-fused -- see prepare_attention_weights)
# --------------------------------------------------------------------------
@partial(jax.jit, static_argnames=("hidden_dim",))
def attention_block(x, w_qkv, b_qkv, *, hidden_dim):
    B, S, D = x.shape
    H = hidden_dim
    Hp = w_qkv.shape[1] // 3

    budget = _vmem_budget_bytes()
    Bt = _pick_batch_block(B, S, D, H, Hp, budget)

    # Pad B up to a multiple of Bt (masked tail) rather than shrinking Bt.
    Bp = pl.cdiv(B, Bt) * Bt
    x_in = x if Bp == B else jnp.pad(x, ((0, Bp - B), (0, 0), (0, 0)))

    full2d = lambda b: (0, 0)
    out = pl.pallas_call(
        attn_kernel,
        out_shape=jax.ShapeDtypeStruct((Bp, S, H), x.dtype),
        grid=(Bp // Bt,),
        in_specs=[
            pl.BlockSpec((Bt, S, D), lambda b: (b, 0, 0)),   # x batch block
            pl.BlockSpec((D, 3 * Hp), full2d),               # fused Wqkv (bf16)
            pl.BlockSpec((1, 3 * Hp), full2d),               # fused bias (f32)
        ],
        out_specs=pl.BlockSpec((Bt, S, H), lambda b: (b, 0, 0)),
        compiler_params=pltpu.CompilerParams(
            dimension_semantics=("parallel",),
            vmem_limit_bytes=budget,
        ),
    )(x_in, w_qkv, b_qkv)
    return out if Bp == B else out[:B]


# --------------------------------------------------------------------------
# Pure-JAX reference and test
# --------------------------------------------------------------------------
def reference(x, wq, bq, wk, bk, wv, bv):
    q = x @ wq + bq
    k = x @ wk + bk
    v = x @ wv + bv
    h = q.shape[-1]
    scores = jnp.einsum("bsh,bsk->bhk", q, k) / jnp.sqrt(jnp.float32(h))
    weights = jax.nn.softmax(scores, axis=-1)
    return jnp.einsum("bsh,bhk->bsk", v, weights)


if __name__ == "__main__":
    B, S, D, H = 2, 8, 16, 32   # batch, seq, input_dim, hidden_dim

    key = jax.random.PRNGKey(0)
    kx, kq, kbq, kk, kbk, kv, kbv = jax.random.split(key, 7)

    # Deterministic parameter init (Linear-style uniform(-1/sqrt(D), 1/sqrt(D)))
    bound = 1.0 / (D ** 0.5)
    x = jax.random.normal(kx, (B, S, D), dtype=jnp.float32)
    wq = jax.random.uniform(kq, (D, H), jnp.float32, -bound, bound)
    bq = jax.random.uniform(kbq, (1, H), jnp.float32, -bound, bound)
    wk = jax.random.uniform(kk, (D, H), jnp.float32, -bound, bound)
    bk = jax.random.uniform(kbk, (1, H), jnp.float32, -bound, bound)
    wv = jax.random.uniform(kv, (D, H), jnp.float32, -bound, bound)
    bv = jax.random.uniform(kbv, (1, H), jnp.float32, -bound, bound)

    # One-time weight fusion / scale-fold / bf16 cast (off the per-call path).
    w_qkv, b_qkv = prepare_attention_weights(wq, bq, wk, bk, wv, bv)
    w_qkv, b_qkv = jax.block_until_ready((w_qkv, b_qkv))

    out = attention_block(x, w_qkv, b_qkv, hidden_dim=H)
    out = jax.block_until_ready(out)

    ref = reference(x, wq, bq, wk, bk, wv, bv)
    assert out.shape == (B, S, H)
    # bf16 MXU operands (with f32 accumulation) + approx reciprocal need a
    # looser tolerance than an all-f32 kernel.
    assert jnp.allclose(out, ref, atol=5e-2, rtol=5e-2), "mismatch vs reference"

    print("KERNEL_OK")
</pallas_src>

<mosaic_0001>
module attributes {stable_mosaic.version = 11 : i64} {
  func.func @attn_kernel(%arg0: i32, %arg1: memref<2x8x16xf32, #tpu.memory_space<vmem>>, %arg2: memref<16x384xbf16, #tpu.memory_space<vmem>>, %arg3: memref<1x384xf32, #tpu.memory_space<vmem>>, %arg4: memref<2x8x32xf32, #tpu.memory_space<vmem>>) attributes {dimension_semantics = [#tpu.dimension_semantics<parallel>], iteration_bounds = array<i64: 1>, scalar_prefetch = 0 : i64, scratch_operands = 0 : i64, tpu.core_type = #tpu.core_type<tc>, window_params = [{transform_indices = @transform_0, window_bounds = array<i64: 2, 8, 16>}, {pipeline_mode = #tpu.pipeline_mode<synchronous>, transform_indices = @transform_1, window_bounds = array<i64: 16, 384>}, {pipeline_mode = #tpu.pipeline_mode<synchronous>, transform_indices = @transform_2, window_bounds = array<i64: 1, 384>}, {transform_indices = @transform_3, window_bounds = array<i64: 2, 8, 32>}]} {
    %c0 = arith.constant 0 : index
    %c0_0 = arith.constant 0 : index
    %c0_1 = arith.constant 0 : index
    %0 = vector.load %arg1[%c0, %c0_0, %c0_1] : memref<2x8x16xf32, #tpu.memory_space<vmem>>, vector<2x8x16xf32>
    %1 = vector.shape_cast %0 : vector<2x8x16xf32> to vector<16x16xf32>
    %2 = arith.truncf %1 : vector<16x16xf32> to vector<16x16xbf16>
    %c0_2 = arith.constant 0 : index
    %c0_3 = arith.constant 0 : index
    %3 = vector.load %arg2[%c0_2, %c0_3] : memref<16x384xbf16, #tpu.memory_space<vmem>>, vector<16x384xbf16>
    %cst = arith.constant dense<0.000000e+00> : vector<16x384xf32>
    %4 = tpu.matmul %2, %3, %cst {dimension_numbers = #tpu.dot_dimension_numbers<[1], [0], [0], [1], [0, 0, 1, 1], [], []>} : vector<16x16xbf16>, vector<16x384xbf16>, vector<16x384xf32> -> vector<16x384xf32>
    %c0_4 = arith.constant 0 : index
    %c0_5 = arith.constant 0 : index
    %5 = vector.load %arg3[%c0_4, %c0_5] : memref<1x384xf32, #tpu.memory_space<vmem>>, vector<1x384xf32>
    %6 = vector.broadcast %5 : vector<1x384xf32> to vector<16x384xf32>
    %7 = arith.addf %4, %6 : vector<16x384xf32>
    %8 = vector.shape_cast %7 : vector<16x384xf32> to vector<2x8x384xf32>
    %9 = vector.extract_strided_slice %8 {offsets = [0, 0, 0], sizes = [2, 8, 32], strides = [1, 1, 1]} : vector<2x8x384xf32> to vector<2x8x32xf32>
    %10 = arith.truncf %9 : vector<2x8x32xf32> to vector<2x8x32xbf16>
    %11 = vector.extract_strided_slice %8 {offsets = [0, 0, 128], sizes = [2, 8, 32], strides = [1, 1, 1]} : vector<2x8x384xf32> to vector<2x8x32xf32>
    %12 = arith.truncf %11 : vector<2x8x32xf32> to vector<2x8x32xbf16>
    %13 = vector.extract_strided_slice %8 {offsets = [0, 0, 256], sizes = [2, 8, 32], strides = [1, 1, 1]} : vector<2x8x384xf32> to vector<2x8x32xf32>
    %14 = arith.truncf %13 : vector<2x8x32xf32> to vector<2x8x32xbf16>
    "tpu.trace_start"() <{level = 10 : i32, message = "bsh,bsk->bhk"}> : () -> ()
    %cst_6 = arith.constant dense<0.000000e+00> : vector<2x32x32xf32>
    %15 = tpu.matmul %10, %12, %cst_6 {dimension_numbers = #tpu.dot_dimension_numbers<[1], [1], [2], [2], [0, 0, 0, 2, 1, 2], [0], [0]>} : vector<2x8x32xbf16>, vector<2x8x32xbf16>, vector<2x32x32xf32> -> vector<2x32x32xf32>
    "tpu.trace_stop"() : () -> ()
    %cst_7 = arith.constant dense<0xFF800000> : vector<2x32xf32>
    %16 = vector.multi_reduction <maximumf>, %15, %cst_7 [2] : vector<2x32x32xf32> to vector<2x32xf32>
    %17 = vector.shape_cast %16 : vector<2x32xf32> to vector<2x32x1xf32>
    %18 = vector.broadcast %17 : vector<2x32x1xf32> to vector<2x32x32xf32>
    %19 = arith.subf %15, %18 : vector<2x32x32xf32>
    %20 = math.exp %19 : vector<2x32x32xf32>
    %cst_8 = arith.constant dense<0.000000e+00> : vector<2x32xf32>
    %21 = vector.multi_reduction <add>, %20, %cst_8 [2] : vector<2x32x32xf32> to vector<2x32xf32>
    %22 = vector.shape_cast %21 : vector<2x32xf32> to vector<2x32x1xf32>
    %23 = tpu.reciprocal %22 {approx = true} : vector<2x32x1xf32> -> vector<2x32x1xf32>
    %24 = vector.broadcast %23 : vector<2x32x1xf32> to vector<2x32x32xf32>
    %25 = arith.mulf %20, %24 : vector<2x32x32xf32>
    %26 = arith.truncf %25 : vector<2x32x32xf32> to vector<2x32x32xbf16>
    "tpu.trace_start"() <{level = 10 : i32, message = "bsh,bhk->bsk"}> : () -> ()
    %cst_9 = arith.constant dense<0.000000e+00> : vector<2x8x32xf32>
    %27 = tpu.matmul %14, %26, %cst_9 {dimension_numbers = #tpu.dot_dimension_numbers<[2], [1], [1], [2], [0, 0, 0, 1, 1, 2], [0], [0]>} : vector<2x8x32xbf16>, vector<2x32x32xbf16>, vector<2x8x32xf32> -> vector<2x8x32xf32>
    "tpu.trace_stop"() : () -> ()
    %c0_10 = arith.constant 0 : index
    %c0_11 = arith.constant 0 : index
    %c0_12 = arith.constant 0 : index
    %28 = vector.load %arg4[%c0_10, %c0_11, %c0_12] : memref<2x8x32xf32, #tpu.memory_space<vmem>>, vector<2x8x32xf32>
    tpu.vector_store %arg4[%c0_10, %c0_11, %c0_12], %27 {strides = array<i32>} : memref<2x8x32xf32, #tpu.memory_space<vmem>>, vector<2x8x32xf32>,
    return
  }
  func.func @transform_0(%arg0: i32) -> (i32, i32, i32) {
    %c0_i32 = arith.constant 0 : i32
    %c0_i32_0 = arith.constant 0 : i32
    %c0_i32_1 = arith.constant 0 : i32
    return %arg0, %c0_i32, %c0_i32_0 : i32, i32, i32
  }
  func.func @transform_1(%arg0: i32) -> (i32, i32) {
    %c0_i32 = arith.constant 0 : i32
    %c0_i32_0 = arith.constant 0 : i32
    %c0_i32_1 = arith.constant 0 : i32
    return %c0_i32, %c0_i32_0 : i32, i32
  }
  func.func @transform_2(%arg0: i32) -> (i32, i32) {
    %c0_i32 = arith.constant 0 : i32
    %c0_i32_0 = arith.constant 0 : i32
    %c0_i32_1 = arith.constant 0 : i32
    return %c0_i32, %c0_i32_0 : i32, i32
  }
  func.func @transform_3(%arg0: i32) -> (i32, i32, i32) {
    %c0_i32 = arith.constant 0 : i32
    %c0_i32_0 = arith.constant 0 : i32
    %c0_i32_1 = arith.constant 0 : i32
    return %arg0, %c0_i32, %c0_i32_0 : i32, i32, i32
  }
}

</mosaic_0001>

<llo_original>
// kernel: attention_block.1
$region0: #{attention_block.1}
  #allocation0 [shape = 'u32[]', space=smem, size = 0x4, offset = 0x4, fixed_abs, tag = 'smem constant byte address 0x4 - core index']
  #allocation1 [shape = 'u32[144,128]{1,0:T(1,128)}', space=vmem, size = 0x12000, scoped, tag = 'internal scratch']
  %s0 = inlined_call_operand.hbm [shape: f32[2,8,16], index: 0, kind: input, shape index: {}]
  %s1 = inlined_call_operand.hbm [shape: bf16[16,384], index: 1, kind: input, shape index: {}]
  %s2 = inlined_call_operand.vmem [shape: f32[1,384], index: 2, kind: input, shape index: {}]
  %s3 = inlined_call_operand.hbm [shape: f32[2,8,32], index: 3, kind: output, shape index: {}]
  %s4 = sld [smem:[#allocation0]]
  $region30: #{attention_block.1} parent=0
    _
  %s6 = ssub.s32 1, %s4
  %s7 = scalar_select 0, %s6, %s4
  $region1: #{attention_block.1} parent=0
    #allocation2 [shape = 'u8[8192]{0}', space=vmem, size = 0x2000, scoped, tag = 'input window, operand 0, single buffered']
    #allocation3 [shape = 's32[1]{0}', space=sflag, size = 0x4, scoped, tag = 'scoped memory for attention_block.1']
    #allocation4 [shape = 's32[1]{0}', space=sflag, size = 0x4, scoped, tag = 'scoped memory for attention_block.1']
    #allocation5 [shape = 'u8[12288]{0}', space=vmem, size = 0x3000, scoped, tag = 'input window, operand 1, single buffered']
    #allocation6 [shape = 's32[1]{0}', space=sflag, size = 0x4, scoped, tag = 'scoped memory for attention_block.1']
    #allocation7 [shape = 'u8[8192]{0}', space=vmem, size = 0x2000, scoped, tag = 'output window, operand 0, single buffered']
    %8 = vsyncpa [#allocation3], 0
    %9 = vsyncpa [#allocation6], 0
    %10 = vsyncpa [#allocation4], 0
    // Predicated region
    $region2: #{attention_block.1} parent=1 // pred_check
      _
    $region3: #{attention_block.1} parent=1 // pred_check_branch
      %12 = sbr.rel (0) target = $region5
    $region4: #{attention_block.1} parent=1 // pred_region
      %s14 = ssub.s32 256, 256
      %15 = vsyncadd [#allocation3], %s14
      %s16 = sshll.u32 [#allocation2], 4
      %s17 = int_to_ptr.vmem [resolvable:$true] %s16
      %22 = dma.hbm_to_vmem [thread:$0]  %s0, 256, %s17, [#allocation3], 128, 128, 8
    $region5: #{attention_block.1} parent=1 // pred_fallthru
      _
    // Predicated region
    $region6: #{attention_block.1} parent=1 // pred_check
      _
    $region7: #{attention_block.1} parent=1 // pred_check_branch
      %24 = sbr.rel (0) target = $region9
    $region8: #{attention_block.1} parent=1 // pred_region
      %s26 = ssub.s32 384, 384
      %27 = vsyncadd [#allocation6], %s26
      %s28 = sshll.u32 [#allocation5], 4
      %s29 = int_to_ptr.vmem [resolvable:$true] %s28
      %34 = dma.hbm_to_vmem [thread:$0]  %s1, 384, %s29, [#allocation6], 192, 192, 12
    $region9: #{attention_block.1} parent=1 // pred_fallthru
      _
    // Predicated region
    $region10: #{attention_block.1} parent=1 // pred_check
      _
    $region11: #{attention_block.1} parent=1 // pred_check_branch
      %36 = sbr.rel (0) target = $region13
    $region12: #{attention_block.1} parent=1 // pred_region
      _
    $region13: #{attention_block.1} parent=1 // pred_fallthru
      _
    // Predicated region
    $region14: #{attention_block.1} parent=1 // pred_check
      _
    $region15: #{attention_block.1} parent=1 // pred_check_branch
      %38 = sbr.rel (0) target = $region17
    $region16: #{attention_block.1} parent=1 // pred_region
      %39 = dma.done [#allocation3], 256
    $region17: #{attention_block.1} parent=1 // pred_fallthru
      _
    // Predicated region
    $region18: #{attention_block.1} parent=1 // pred_check
      _
    $region19: #{attention_block.1} parent=1 // pred_check_branch
      %41 = sbr.rel (0) target = $region21
    $region20: #{attention_block.1} parent=1 // pred_region
      %42 = dma.done [#allocation6], 384
    $region21: #{attention_block.1} parent=1 // pred_fallthru
      _
    %v44 = vld [vmem:[#allocation2] sm:$0xff]
    %v45 = vld [vmem:[#allocation2 + $0x8] sm:$0xff]
    %v46 = vpack.c.bf16 %v45, %v44
    %v47 = vld [vmem:[#allocation5] sm:$0xff]
    %v48 = vld [vmem:[#allocation5 + $0x8] sm:$0xf]
    %v49 = vld [vmem:[#allocation5 + $0xc] sm:$0xff]
    %v50 = vld [vmem:[#allocation5 + $0x14] sm:$0xf]
    %v51 = vld [vmem:[%s2] sm:$0x7]
    %v53 = vlaneseq
    %v54 = vshrl.u32 %v53, 7
    %v55 = vsub.s32 0, %v54
    %v56 = vrot.slane %v51, %v55
    %v57 = vlaneseq
    %v58 = vshrl.u32 %v57, 7
    %v59 = vsub.s32 1, %v58
    %v60 = vrot.slane %v51, %v59
    %v61 = vlaneseq
    %v62 = vshrl.u32 %v61, 7
    %v63 = vsub.s32 2, %v62
    %v64 = vrot.slane %v51, %v63
    %v72 = vunpack.c.l.b16 %v47
    %v73 = vunpack.c.h.b16 %v47
    %v74 = vunpack.c.l.b16 %v48
    %v75 = vunpack.c.l.b16 %v49
    %v76 = vunpack.c.h.b16 %v49
    %v77 = vunpack.c.l.b16 %v50
    %v78 = vpack.c.b16 %v75, %v72
    %v79 = vpack.c.b16 %v76, %v73
    %v80 = vpack.c.b16 %v77, %v74
    %vm84 = vcmask 130048
    %v86 = vsel %vm84, %v46, 0
    %88 = vmatprep.subr.bf16.mxu0 %v79
    %89 = vmatpush1.bf16.msra.mxu0 %v78
    %90 = vmatprep.subr.bf16.mxu0 0
    %91 = vmatpush1.bf16.msra.mxu0 0
    %92 = vmatprep.subr.bf16.mxu0 0
    %93 = vmatpush1.bf16.msra.mxu0 0
    %94 = vmatprep.subr.bf16.mxu0 0
    %95 = vmatpush1.bf16.msra.mxu0 0
    %96 = vmatprep.subr.bf16.mxu0 0
    %97 = vmatpush1.bf16.msra.mxu0 0
    %98 = vmatprep.subr.bf16.mxu0 0
    %99 = vmatpush1.bf16.msra.mxu0 0
    %100 = vmatprep.subr.bf16.mxu0 0
    %101 = vmatpush1.bf16.msra.mxu0 0
    %102 = vmatprep.subr.bf16.mxu0 0
    %103 = vmatpush1.bf16.msra.mxu0 0
    %104 = vmatprep.subr.bf16.mxu0 0
    %105 = vmatpush1.bf16.msra.mxu0 0
    %106 = vmatprep.subr.bf16.mxu0 0
    %107 = vmatpush1.bf16.msra.mxu0 0
    %108 = vmatprep.subr.bf16.mxu0 0
    %109 = vmatpush1.bf16.msra.mxu0 0
    %110 = vmatprep.subr.bf16.mxu0 0
    %111 = vmatpush1.bf16.msra.mxu0 0
    %112 = vmatprep.subr.bf16.mxu0 0
    %113 = vmatpush1.bf16.msra.mxu0 0
    %114 = vmatprep.subr.bf16.mxu0 0
    %115 = vmatpush1.bf16.msra.mxu0 0
    %116 = vmatprep.subr.bf16.mxu0 0
    %117 = vmatpush1.bf16.msra.mxu0 0
    %118 = vmatprep.subr.bf16.mxu0 0
    %119 = vmatpush1.bf16.msra.mxu0 0
    %120 = vmatprep.mubr.bf16.mxu0 0
    %121 = vmatmul.mubr.bf16.gmra.mrb[0].mxu0 %v86
    %v122 = vpop.f32.mrb[0].mxu0
    %v123 = vadd.f32 %v56, %v122
    %v124 = vpop.f32.mrb[0].mxu0
    %v125 = vadd.f32 %v60, %v124
    %v126 = vpop.f32.mrb[0].mxu0
    %v127 = vadd.f32 %v56, %v126
    %v128 = vpop.f32.mrb[0].mxu0
    %v129 = vadd.f32 %v60, %v128
    %130 = vdwg.mxu0
    %131 = vmatprep.subr.bf16.mxu0 0
    %132 = vmatpush1.bf16.msra.mxu0 %v80
    %133 = vmatprep.subr.bf16.mxu0 0
    %134 = vmatpush1.bf16.msra.mxu0 0
    %135 = vmatprep.subr.bf16.mxu0 0
    %136 = vmatpush1.bf16.msra.mxu0 0
    %137 = vmatprep.subr.bf16.mxu0 0
    %138 = vmatpush1.bf16.msra.mxu0 0
    %139 = vmatprep.subr.bf16.mxu0 0
    %140 = vmatpush1.bf16.msra.mxu0 0
    %141 = vmatprep.subr.bf16.mxu0 0
    %142 = vmatpush1.bf16.msra.mxu0 0
    %143 = vmatprep.subr.bf16.mxu0 0
    %144 = vmatpush1.bf16.msra.mxu0 0
    %145 = vmatprep.subr.bf16.mxu0 0
    %146 = vmatpush1.bf16.msra.mxu0 0
    %147 = vmatprep.subr.bf16.mxu0 0
    %148 = vmatpush1.bf16.msra.mxu0 0
    %149 = vmatprep.subr.bf16.mxu0 0
    %150 = vmatpush1.bf16.msra.mxu0 0
    %151 = vmatprep.subr.bf16.mxu0 0
    %152 = vmatpush1.bf16.msra.mxu0 0
    %153 = vmatprep.subr.bf16.mxu0 0
    %154 = vmatpush1.bf16.msra.mxu0 0
    %155 = vmatprep.subr.bf16.mxu0 0
    %156 = vmatpush1.bf16.msra.mxu0 0
    %157 = vmatprep.subr.bf16.mxu0 0
    %158 = vmatpush1.bf16.msra.mxu0 0
    %159 = vmatprep.subr.bf16.mxu0 0
    %160 = vmatpush1.bf16.msra.mxu0 0
    %161 = vmatprep.subr.bf16.mxu0 0
    %162 = vmatpush1.bf16.msra.mxu0 0
    %163 = vmatprep.mubr.bf16.mxu0 0
    %164 = vmatmul.mubr.bf16.gmra.mrb[0].mxu0 %v86
    %v165 = vpop.f32.mrb[0].mxu0
    %v166 = vadd.f32 %v64, %v165
    %v167 = vpop.f32.mrb[0].mxu0
    %v168 = vpop.f32.mrb[0].mxu0
    %v169 = vadd.f32 %v64, %v168
    %v170 = vpop.f32.mrb[0].mxu0
    %171 = vdwg.mxu0
    %v172 = vpack.c.bf16 %v123, %v123
    %v173 = vpack.c.bf16 %v127, %v127
    %v174 = vpack.c.bf16 %v125, %v125
    %v175 = vpack.c.bf16 %v129, %v129
    %v176 = vpack.c.bf16 %v166, %v166
    %v177 = vpack.c.bf16 %v169, %v169
    %178 = vxpose.xlu0.c.b16.start [1/8] %v172, 128
    %179 = vxpose.xlu0.c.b16.cont [2/8] 0, 128
    %180 = vxpose.xlu0.c.b16.cont [3/8] 0, 128
    %181 = vxpose.xlu0.c.b16.cont [4/8] 0, 128
    %182 = vxpose.xlu0.c.b16.cont [5/8] 0, 128
    %183 = vxpose.xlu0.c.b16.cont [6/8] 0, 128
    %184 = vxpose.xlu0.c.b16.cont [7/8] 0, 128
    %185 = vxpose.xlu0.c.b16.end [8/8] 0, 128
    %v186 = vpop.trf.xlu0
    %v187 = vpop.trf.xlu0
    %v188 = vpop.trf.xlu0
    %v189 = vpop.trf.xlu0
    %v190 = vpop.trf.xlu0
    %v191 = vpop.trf.xlu0
    %v192 = vpop.trf.xlu0
    %v193 = vpop.trf.xlu0
    %vm194 = vcmask 64512
    %v196 = vsel %vm194, %v186, 0
    %v199 = vsel %vm194, %v187, 0
    %vm201 = vcmask 1043456
    %v203 = vsel %vm201, %v174, 0
    %205 = vmatprep.subr.bf16.mxu0 0
    %206 = vmatpush1.bf16.msra.mxu0 %v203
    %207 = vmatprep.subr.bf16.mxu0 0
    %208 = vmatpush1.bf16.msra.mxu0 0
    %209 = vmatprep.subr.bf16.mxu0 0
    %210 = vmatpush1.bf16.msra.mxu0 0
    %211 = vmatprep.subr.bf16.mxu0 0
    %212 = vmatpush1.bf16.msra.mxu0 0
    %213 = vmatprep.subr.bf16.mxu0 0
    %214 = vmatpush1.bf16.msra.mxu0 0
    %215 = vmatprep.subr.bf16.mxu0 0
    %216 = vmatpush1.bf16.msra.mxu0 0
    %217 = vmatprep.subr.bf16.mxu0 0
    %218 = vmatpush1.bf16.msra.mxu0 0
    %219 = vmatprep.subr.bf16.mxu0 0
    %220 = vmatpush1.bf16.msra.mxu0 0
    %221 = vmatprep.subr.bf16.mxu0 0
    %222 = vmatpush1.bf16.msra.mxu0 0
    %223 = vmatprep.subr.bf16.mxu0 0
    %224 = vmatpush1.bf16.msra.mxu0 0
    %225 = vmatprep.subr.bf16.mxu0 0
    %226 = vmatpush1.bf16.msra.mxu0 0
    %227 = vmatprep.subr.bf16.mxu0 0
    %228 = vmatpush1.bf16.msra.mxu0 0
    %229 = vmatprep.subr.bf16.mxu0 0
    %230 = vmatpush1.bf16.msra.mxu0 0
    %231 = vmatprep.subr.bf16.mxu0 0
    %232 = vmatpush1.bf16.msra.mxu0 0
    %233 = vmatprep.subr.bf16.mxu0 0
    %234 = vmatpush1.bf16.msra.mxu0 0
    %235 = vmatprep.subr.bf16.mxu0 0
    %236 = vmatpush1.bf16.msra.mxu0 0
    %237 = vmatprep.mubr.bf16.mxu0 0
    %238 = vmatmul.mubr.bf16.gmra.mrb[0].mxu0 %v196
    %v239 = vpop.f32.mrb[0].mxu0
    %v240 = vadd.f32 0.0, %v239
    %v241 = vpop.f32.mrb[0].mxu0
    %v242 = vpop.f32.mrb[0].mxu0
    %v243 = vadd.f32 0.0, %v242
    %v244 = vpop.f32.mrb[0].mxu0
    %245 = vmatprep.mubr.bf16.mxu0 0
    %246 = vmatmul.mubr.bf16.gmra.mrb[0].mxu0 %v199
    %v247 = vpop.f32.mrb[0].mxu0
    %v248 = vadd.f32 0.0, %v247
    %v249 = vpop.f32.mrb[0].mxu0
    %v250 = vpop.f32.mrb[0].mxu0
    %v251 = vadd.f32 0.0, %v250
    %v252 = vpop.f32.mrb[0].mxu0
    %253 = vdwg.mxu0
    %254 = vxpose.xlu0.c.b16.start [1/8] %v173, 128
    %255 = vxpose.xlu0.c.b16.cont [2/8] 0, 128
    %256 = vxpose.xlu0.c.b16.cont [3/8] 0, 128
    %257 = vxpose.xlu0.c.b16.cont [4/8] 0, 128
    %258 = vxpose.xlu0.c.b16.cont [5/8] 0, 128
    %259 = vxpose.xlu0.c.b16.cont [6/8] 0, 128
    %260 = vxpose.xlu0.c.b16.cont [7/8] 0, 128
    %261 = vxpose.xlu0.c.b16.end [8/8] 0, 128
    %v262 = vpop.trf.xlu0
    %v263 = vpop.trf.xlu0
    %v264 = vpop.trf.xlu0
    %v265 = vpop.trf.xlu0
    %v266 = vpop.trf.xlu0
    %v267 = vpop.trf.xlu0
    %v268 = vpop.trf.xlu0
    %v269 = vpop.trf.xlu0
    %v271 = vsel %vm194, %v262, 0
    %v274 = vsel %vm194, %v263, 0
    %v277 = vsel %vm201, %v175, 0
    %279 = vmatprep.subr.bf16.mxu0 0
    %280 = vmatpush1.bf16.msra.mxu0 %v277
    %281 = vmatprep.subr.bf16.mxu0 0
    %282 = vmatpush1.bf16.msra.mxu0 0
    %283 = vmatprep.subr.bf16.mxu0 0
    %284 = vmatpush1.bf16.msra.mxu0 0
    %285 = vmatprep.subr.bf16.mxu0 0
    %286 = vmatpush1.bf16.msra.mxu0 0
    %287 = vmatprep.subr.bf16.mxu0 0
    %288 = vmatpush1.bf16.msra.mxu0 0
    %289 = vmatprep.subr.bf16.mxu0 0
    %290 = vmatpush1.bf16.msra.mxu0 0
    %291 = vmatprep.subr.bf16.mxu0 0
    %292 = vmatpush1.bf16.msra.mxu0 0
    %293 = vmatprep.subr.bf16.mxu0 0
    %294 = vmatpush1.bf16.msra.mxu0 0
    %295 = vmatprep.subr.bf16.mxu0 0
    %296 = vmatpush1.bf16.msra.mxu0 0
    %297 = vmatprep.subr.bf16.mxu0 0
    %298 = vmatpush1.bf16.msra.mxu0 0
    %299 = vmatprep.subr.bf16.mxu0 0
    %300 = vmatpush1.bf16.msra.mxu0 0
    %301 = vmatprep.subr.bf16.mxu0 0
    %302 = vmatpush1.bf16.msra.mxu0 0
    %303 = vmatprep.subr.bf16.mxu0 0
    %304 = vmatpush1.bf16.msra.mxu0 0
    %305 = vmatprep.subr.bf16.mxu0 0
    %306 = vmatpush1.bf16.msra.mxu0 0
    %307 = vmatprep.subr.bf16.mxu0 0
    %308 = vmatpush1.bf16.msra.mxu0 0
    %309 = vmatprep.subr.bf16.mxu0 0
    %310 = vmatpush1.bf16.msra.mxu0 0
    %311 = vmatprep.mubr.bf16.mxu0 0
    %312 = vmatmul.mubr.bf16.gmra.mrb[0].mxu0 %v271
    %v313 = vpop.f32.mrb[0].mxu0
    %v314 = vadd.f32 0.0, %v313
    %v315 = vpop.f32.mrb[0].mxu0
    %v316 = vpop.f32.mrb[0].mxu0
    %v317 = vadd.f32 0.0, %v316
    %v318 = vpop.f32.mrb[0].mxu0
    %319 = vmatprep.mubr.bf16.mxu0 0
    %320 = vmatmul.mubr.bf16.gmra.mrb[0].mxu0 %v274
    %v321 = vpop.f32.mrb[0].mxu0
    %v322 = vadd.f32 0.0, %v321
    %v323 = vpop.f32.mrb[0].mxu0
    %v324 = vpop.f32.mrb[0].mxu0
    %v325 = vadd.f32 0.0, %v324
    %v326 = vpop.f32.mrb[0].mxu0
    %327 = vdwg.mxu0
    %vm328 = vcmask 261120
    %v329 = vsel %vm328, %v240, -inf
    %330 = vmax.xlane.f32.xlu0 %v329
    %v331 = vpop.xlane.xlu0 %330
    %v332 = vsel %vm328, %v243, -inf
    %333 = vmax.xlane.f32.xlu0 %v332
    %v334 = vpop.xlane.xlu0 %333
    %v335 = vsel %vm328, %v248, -inf
    %336 = vmax.xlane.f32.xlu0 %v335
    %v337 = vpop.xlane.xlu0 %336
    %v338 = vsel %vm328, %v251, -inf
    %339 = vmax.xlane.f32.xlu0 %v338
    %v340 = vpop.xlane.xlu0 %339
    %v341 = vsel %vm328, %v314, -inf
    %342 = vmax.xlane.f32.xlu0 %v341
    %v343 = vpop.xlane.xlu0 %342
    %v344 = vsel %vm328, %v317, -inf
    %345 = vmax.xlane.f32.xlu0 %v344
    %v346 = vpop.xlane.xlu0 %345
    %v347 = vsel %vm328, %v322, -inf
    %348 = vmax.xlane.f32.xlu0 %v347
    %v349 = vpop.xlane.xlu0 %348
    %v350 = vsel %vm328, %v325, -inf
    %351 = vmax.xlane.f32.xlu0 %v350
    %v352 = vpop.xlane.xlu0 %351
    %v353 = vsub.f32 %v240, %v331
    %v354 = vsub.f32 %v243, %v334
    %v355 = vsub.f32 %v248, %v337
    %v356 = vsub.f32 %v251, %v340
    %v357 = vsub.f32 %v314, %v343
    %v358 = vsub.f32 %v317, %v346
    %v359 = vsub.f32 %v322, %v349
    %v360 = vsub.f32 %v325, %v352
    %v361 = vmul.f32 %v353, 1.442695
    %v362 = vpow.pop %v361
    %v363 = vmul.f32 %v354, 1.442695
    %v364 = vpow.pop %v363
    %v365 = vmul.f32 %v355, 1.442695
    %v366 = vpow.pop %v365
    %v367 = vmul.f32 %v356, 1.442695
    %v368 = vpow.pop %v367
    %v369 = vmul.f32 %v357, 1.442695
    %v370 = vpow.pop %v369
    %v371 = vmul.f32 %v358, 1.442695
    %v372 = vpow.pop %v371
    %v373 = vmul.f32 %v359, 1.442695
    %v374 = vpow.pop %v373
    %v375 = vmul.f32 %v360, 1.442695
    %v376 = vpow.pop %v375
    %v377 = vsel %vm328, %v362, 0.0
    %378 = vadd.xlane.f32.xlu0 %v377
    %v379 = vpop.xlane.xlu0 %378
    %v380 = vsel %vm328, %v364, 0.0
    %381 = vadd.xlane.f32.xlu0 %v380
    %v382 = vpop.xlane.xlu0 %381
    %v383 = vsel %vm328, %v366, 0.0
    %384 = vadd.xlane.f32.xlu0 %v383
    %v385 = vpop.xlane.xlu0 %384
    %v386 = vsel %vm328, %v368, 0.0
    %387 = vadd.xlane.f32.xlu0 %v386
    %v388 = vpop.xlane.xlu0 %387
    %v389 = vsel %vm328, %v370, 0.0
    %390 = vadd.xlane.f32.xlu0 %v389
    %v391 = vpop.xlane.xlu0 %390
    %v392 = vsel %vm328, %v372, 0.0
    %393 = vadd.xlane.f32.xlu0 %v392
    %v394 = vpop.xlane.xlu0 %393
    %v395 = vsel %vm328, %v374, 0.0
    %396 = vadd.xlane.f32.xlu0 %v395
    %v397 = vpop.xlane.xlu0 %396
    %v398 = vsel %vm328, %v376, 0.0
    %399 = vadd.xlane.f32.xlu0 %v398
    %v400 = vpop.xlane.xlu0 %399
    %v401 = vrcp.pop %v379
    %v402 = vrcp.pop %v382
    %v403 = vrcp.pop %v385
    %v404 = vrcp.pop %v388
    %v405 = vrcp.pop %v391
    %v406 = vrcp.pop %v394
    %v407 = vrcp.pop %v397
    %v408 = vrcp.pop %v400
    %v409 = vmul.f32 %v362, %v401
    %v410 = vmul.f32 %v364, %v402
    %v411 = vmul.f32 %v366, %v403
    %v412 = vmul.f32 %v368, %v404
    %v413 = vmul.f32 %v370, %v405
    %v414 = vmul.f32 %v372, %v406
    %v415 = vmul.f32 %v374, %v407
    %v416 = vmul.f32 %v376, %v408
    %v417 = vpack.c.bf16 %v410, %v409
    %v418 = vpack.c.bf16 %v412, %v411
    %v419 = vpack.c.bf16 %v414, %v413
    %v420 = vpack.c.bf16 %v416, %v415
    %v422 = vsel %vm328, %v176, 0
    %424 = vmatprep.subr.bf16.mxu0 0
    %425 = vmatpush1.bf16.msra.mxu0 %v417
    %426 = vmatprep.subr.bf16.mxu0 0
    %427 = vmatpush1.bf16.msra.mxu0 %v418
    %428 = vmatprep.subr.bf16.mxu0 0
    %429 = vmatpush1.bf16.msra.mxu0 0
    %430 = vmatprep.subr.bf16.mxu0 0
    %431 = vmatpush1.bf16.msra.mxu0 0
    %432 = vmatprep.subr.bf16.mxu0 0
    %433 = vmatpush1.bf16.msra.mxu0 0
    %434 = vmatprep.subr.bf16.mxu0 0
    %435 = vmatpush1.bf16.msra.mxu0 0
    %436 = vmatprep.subr.bf16.mxu0 0
    %437 = vmatpush1.bf16.msra.mxu0 0
    %438 = vmatprep.subr.bf16.mxu0 0
    %439 = vmatpush1.bf16.msra.mxu0 0
    %440 = vmatprep.subr.bf16.mxu0 0
    %441 = vmatpush1.bf16.msra.mxu0 0
    %442 = vmatprep.subr.bf16.mxu0 0
    %443 = vmatpush1.bf16.msra.mxu0 0
    %444 = vmatprep.subr.bf16.mxu0 0
    %445 = vmatpush1.bf16.msra.mxu0 0
    %446 = vmatprep.subr.bf16.mxu0 0
    %447 = vmatpush1.bf16.msra.mxu0 0
    %448 = vmatprep.subr.bf16.mxu0 0
    %449 = vmatpush1.bf16.msra.mxu0 0
    %450 = vmatprep.subr.bf16.mxu0 0
    %451 = vmatpush1.bf16.msra.mxu0 0
    %452 = vmatprep.subr.bf16.mxu0 0
    %453 = vmatpush1.bf16.msra.mxu0 0
    %454 = vmatprep.subr.bf16.mxu0 0
    %455 = vmatpush1.bf16.msra.mxu0 0
    %456 = vmatprep.mubr.bf16.mxu0 0
    %457 = vmatmul.mubr.bf16.gmra.mrb[0].mxu0 %v422
    %v458 = vpop.f32.mrb[0].mxu0
    %v459 = vadd.f32 0.0, %v458
    %v460 = vpop.f32.mrb[0].mxu0
    %v461 = vpop.f32.mrb[0].mxu0
    %v462 = vpop.f32.mrb[0].mxu0
    %463 = vdwg.mxu0
    %v465 = vsel %vm328, %v177, 0
    %467 = vmatprep.subr.bf16.mxu0 0
    %468 = vmatpush1.bf16.msra.mxu0 %v419
    %469 = vmatprep.subr.bf16.mxu0 0
    %470 = vmatpush1.bf16.msra.mxu0 %v420
    %471 = vmatprep.subr.bf16.mxu0 0
    %472 = vmatpush1.bf16.msra.mxu0 0
    %473 = vmatprep.subr.bf16.mxu0 0
    %474 = vmatpush1.bf16.msra.mxu0 0
    %475 = vmatprep.subr.bf16.mxu0 0
    %476 = vmatpush1.bf16.msra.mxu0 0
    %477 = vmatprep.subr.bf16.mxu0 0
    %478 = vmatpush1.bf16.msra.mxu0 0
    %479 = vmatprep.subr.bf16.mxu0 0
    %480 = vmatpush1.bf16.msra.mxu0 0
    %481 = vmatprep.subr.bf16.mxu0 0
    %482 = vmatpush1.bf16.msra.mxu0 0
    %483 = vmatprep.subr.bf16.mxu0 0
    %484 = vmatpush1.bf16.msra.mxu0 0
    %485 = vmatprep.subr.bf16.mxu0 0
    %486 = vmatpush1.bf16.msra.mxu0 0
    %487 = vmatprep.subr.bf16.mxu0 0
    %488 = vmatpush1.bf16.msra.mxu0 0
    %489 = vmatprep.subr.bf16.mxu0 0
    %490 = vmatpush1.bf16.msra.mxu0 0
    %491 = vmatprep.subr.bf16.mxu0 0
    %492 = vmatpush1.bf16.msra.mxu0 0
    %493 = vmatprep.subr.bf16.mxu0 0
    %494 = vmatpush1.bf16.msra.mxu0 0
    %495 = vmatprep.subr.bf16.mxu0 0
    %496 = vmatpush1.bf16.msra.mxu0 0
    %497 = vmatprep.subr.bf16.mxu0 0
    %498 = vmatpush1.bf16.msra.mxu0 0
    %499 = vmatprep.mubr.bf16.mxu0 0
    %500 = vmatmul.mubr.bf16.gmra.mrb[0].mxu0 %v465
    %v501 = vpop.f32.mrb[0].mxu0
    %v502 = vadd.f32 0.0, %v501
    %v503 = vpop.f32.mrb[0].mxu0
    %v504 = vpop.f32.mrb[0].mxu0
    %v505 = vpop.f32.mrb[0].mxu0
    %506 = vdwg.mxu0
    %507 = vst.msk [vmem:[#allocation7] sm:$0xff] %vm328, %v459
    %508 = vst.msk [vmem:[#allocation7 + $0x8] sm:$0xff] %vm328, %v502
    // Predicated region
    $region22: #{attention_block.1} parent=1 // pred_check
      _
    $region23: #{attention_block.1} parent=1 // pred_check_branch
      %510 = sbr.rel (0) target = $region25
    $region24: #{attention_block.1} parent=1 // pred_region
      %s512 = ssub.s32 256, 256
      %513 = vsyncadd [#allocation4], %s512
      %s514 = sshll.u32 [#allocation7], 4
      %s515 = int_to_ptr.vmem [resolvable:$true] %s514
      %520 = dma.vmem_to_hbm [thread:$0]  %s515, 256, %s3, [#allocation4], 128, 128, 8
    $region25: #{attention_block.1} parent=1 // pred_fallthru
      _
    // Predicated region
    $region26: #{attention_block.1} parent=1 // pred_check
      _
    $region27: #{attention_block.1} parent=1 // pred_check_branch
      %522 = sbr.rel (0) target = $region29
    $region28: #{attention_block.1} parent=1 // pred_region
      %523 = dma.done [#allocation4], 256
    $region29: #{attention_block.1} parent=1 // pred_fallthru
      _
    %524 = vsyncpa [#allocation3], 1
    %525 = vsyncpa [#allocation6], 1
    %526 = vsyncpa [#allocation4], 1

</llo_original>
